<compile_context>
chip_gen: v7x
topology: tpu7x:2x2x1
jax: 0.10.0
libtpu: 0.0.40
codegen_flags: <defaults>
</compile_context>

<pallas_src>
import functools

import jax
import jax.numpy as jnp
from jax.experimental import pallas as pl
from jax.experimental.pallas import tpu as pltpu

MAX_LOGSTD = 20.0
LANES = 128

# Scoped-VMEM request: room for 512x1024 bf16 A tiles (double-buffered) plus a
# resident activation slab, while staying under v7x's 64 MiB physical VMEM.
_VMEM_LIMIT = 48 * 1024 * 1024
# Budget for keeping the aggregated activation fully resident in VMEM
# (Pallas double-buffers it, so count 2x).  Conservative for v7x.
_RESIDENT_BUDGET = 24 * 1024 * 1024

_COMPILER_PARAMS = pltpu.CompilerParams(
    dimension_semantics=("parallel", "arbitrary"),
    vmem_limit_bytes=_VMEM_LIMIT,
)


def _round_up(x, m):
    return (x + m - 1) // m * m


# ----------------------------------------------------------------------------
# Kernels
# ----------------------------------------------------------------------------
def _agg_bias_kernel(a_ref, g_ref, b_ref, out_ref, acc_ref, *, tk, g_resident):
    """out[i] = sum_k A[i,k] @ G[k] + b."""
    k = pl.program_id(1)

    @pl.when(k == 0)
    def _init():
        acc_ref[...] = jnp.zeros_like(acc_ref)

    if g_resident:
        start = pl.multiple_of(k * tk, tk)
        g = g_ref[pl.ds(start, tk), :]
    else:
        g = g_ref[...]
    acc_ref[...] += jnp.dot(a_ref[...], g, preferred_element_type=jnp.float32)

    @pl.when(k == pl.num_programs(1) - 1)
    def _finalize():
        out_ref[...] = (acc_ref[...] + b_ref[...]).astype(out_ref.dtype)


def _agg_proj_kernel(a_ref, g_ref, bpre_ref, w_ref, bpost_ref, out_ref, acc_ref,
                     *, tk, g_resident):
    """out[i] = ((sum_k A[i,k] @ G[k]) + b_pre) @ W + b_post.

    The projection runs once per row tile in the finalize, with f32 LHS and
    f32 W (small matmul) to limit precision loss across stacked convs.
    """
    k = pl.program_id(1)

    @pl.when(k == 0)
    def _init():
        acc_ref[...] = jnp.zeros_like(acc_ref)

    if g_resident:
        start = pl.multiple_of(k * tk, tk)
        g = g_ref[pl.ds(start, tk), :]
    else:
        g = g_ref[...]
    acc_ref[...] += jnp.dot(a_ref[...], g, preferred_element_type=jnp.float32)

    @pl.when(k == pl.num_programs(1) - 1)
    def _finalize():
        h = acc_ref[...] + bpre_ref[...]
        proj = jnp.dot(h, w_ref[...], preferred_element_type=jnp.float32)
        out_ref[...] = (proj + bpost_ref[...]).astype(out_ref.dtype)


def _head_kernel(a_ref, h_ref, w_ref, b_ref, alpha_ref, noise_ref,
                 z_ref, mu_ref, lv_ref, acc_ref, *, tk, h_resident, h4_pad):
    """Fused mu/logvar heads + reparameterize + PReLU.

    The expensive A @ H3 aggregation is shared by both heads; the finalize
    issues ONE (tm, h3_p) x (h3_p, 2*h4_p) matmul on the concatenated
    [Wmu | Wlv] (fills the 256-wide MXU on v6e/v7x) and splits the result.
    """
    k = pl.program_id(1)

    @pl.when(k == 0)
    def _init():
        acc_ref[...] = jnp.zeros_like(acc_ref)

    if h_resident:
        start = pl.multiple_of(k * tk, tk)
        h = h_ref[pl.ds(start, tk), :]
    else:
        h = h_ref[...]
    acc_ref[...] += jnp.dot(a_ref[...], h, preferred_element_type=jnp.float32)

    @pl.when(k == pl.num_programs(1) - 1)
    def _finalize():
        proj = jnp.dot(acc_ref[...], w_ref[...],
                       preferred_element_type=jnp.float32) + b_ref[...]
        mu = proj[:, :h4_pad]
        lv = proj[:, h4_pad:]
        # training-mode reparameterization: mu + eps * exp(0.5 * clamp(logvar, 20))
        z = mu + noise_ref[...] * jnp.exp(0.5 * jnp.minimum(lv, MAX_LOGSTD))
        # per-channel PReLU
        z = jnp.where(z >= 0.0, z, alpha_ref[...] * z)
        z_ref[...] = z
        mu_ref[...] = mu
        lv_ref[...] = lv          # un-clamped, matching the PyTorch forward


# ----------------------------------------------------------------------------
# Spec helpers
# ----------------------------------------------------------------------------
def _g_operand_spec(n_pad, c, dtype, tk):
    """Resident (DMA once, constant index) vs blocked (re-streamed) G spec."""
    resident_bytes = 2 * n_pad * c * jnp.dtype(dtype).itemsize  # double-buffered
    if resident_bytes <= _RESIDENT_BUDGET:
        return pl.BlockSpec((n_pad, c), lambda i, k: (0, 0)), True
    return pl.BlockSpec((tk, c), lambda i, k: (k, 0)), False


def _pick_tiles(n, tm_target=512, tk_target=1024):
    """Pick (tm, tk, n_pad).

    One shared n_pad is used for both A axes because each pass's output feeds
    the next pass's aggregation; tk is kept a multiple of tm so
    n_pad = round_up(n, tile) (no lcm-quadratic padding).  Tiles are clamped
    for small graphs and >= 2 row tiles are kept when possible so the
    "parallel" row axis can shard across v7x's two TensorCores.
    """
    n_lane = _round_up(n, LANES)
    if n_lane <= tm_target:
        n_pad = n_lane
        tk = n_pad
        tm = max(n_pad // 2, 64)          # n_pad is a multiple of 128 -> tm % 8 == 0
        return tm, tk, n_pad
    tm = tm_target
    tk = min(tk_target, n_lane)
    tk = max(tm, tk - tk % tm)            # multiple of tm
    n_pad_big = _round_up(n_lane, tk)
    n_pad_small = _round_up(n_lane, tm)
    if n_pad_small < n_pad_big:           # prefer less (quadratic-cost) padding
        tk, n_pad = tm, n_pad_small
    else:
        n_pad = n_pad_big
    return tm, tk, n_pad


# ----------------------------------------------------------------------------
# pallas_call wrappers (one tiled, pipelined pass over A_hat each)
# ----------------------------------------------------------------------------
def _gcn_agg_bias(a, g, b, *, out_dtype, tm, tk):
    n_pad = a.shape[0]
    c = g.shape[1]
    grid = (n_pad // tm, n_pad // tk)
    g_spec, g_res = _g_operand_spec(n_pad, c, g.dtype, tk)
    kernel = functools.partial(_agg_bias_kernel, tk=tk, g_resident=g_res)
    flops = 2 * n_pad * n_pad * c
    bytes_accessed = (a.size * a.dtype.itemsize
                      + (1 if g_res else grid[0]) * g.size * g.dtype.itemsize
                      + b.size * b.dtype.itemsize
                      + n_pad * c * jnp.dtype(out_dtype).itemsize)
    return pl.pallas_call(
        kernel,
        out_shape=jax.ShapeDtypeStruct((n_pad, c), out_dtype),
        grid_spec=pltpu.PrefetchScalarGridSpec(
            num_scalar_prefetch=0,
            grid=grid,
            in_specs=[
                pl.BlockSpec((tm, tk), lambda i, k: (i, k)),   # A tile
                g_spec,                                        # G (resident or blocked)
                pl.BlockSpec((1, c), lambda i, k: (0, 0)),     # bias
            ],
            out_specs=pl.BlockSpec((tm, c), lambda i, k: (i, 0)),
            scratch_shapes=[pltpu.VMEM((tm, c), jnp.float32)],
        ),
        compiler_params=_COMPILER_PARAMS,
        cost_estimate=pl.CostEstimate(flops=int(flops), transcendentals=0,
                                      bytes_accessed=int(bytes_accessed)),
    )(a, g, b)


def _gcn_agg_proj(a, g, b_pre, w, b_post, *, out_dtype, tm, tk):
    n_pad = a.shape[0]
    c_in = g.shape[1]
    c_out = w.shape[1]
    grid = (n_pad // tm, n_pad // tk)
    g_spec, g_res = _g_operand_spec(n_pad, c_in, g.dtype, tk)
    kernel = functools.partial(_agg_proj_kernel, tk=tk, g_resident=g_res)
    flops = 2 * n_pad * n_pad * c_in + 2 * n_pad * c_in * c_out
    bytes_accessed = (a.size * a.dtype.itemsize
                      + (1 if g_res else grid[0]) * g.size * g.dtype.itemsize
                      + w.size * w.dtype.itemsize
                      + b_pre.size * b_pre.dtype.itemsize
                      + b_post.size * b_post.dtype.itemsize
                      + n_pad * c_out * jnp.dtype(out_dtype).itemsize)
    return pl.pallas_call(
        kernel,
        out_shape=jax.ShapeDtypeStruct((n_pad, c_out), out_dtype),
        grid_spec=pltpu.PrefetchScalarGridSpec(
            num_scalar_prefetch=0,
            grid=grid,
            in_specs=[
                pl.BlockSpec((tm, tk), lambda i, k: (i, k)),       # A tile
                g_spec,                                            # G
                pl.BlockSpec((1, c_in), lambda i, k: (0, 0)),      # pre-proj bias
                pl.BlockSpec((c_in, c_out), lambda i, k: (0, 0)),  # W (f32, small)
                pl.BlockSpec((1, c_out), lambda i, k: (0, 0)),     # post-proj bias
            ],
            out_specs=pl.BlockSpec((tm, c_out), lambda i, k: (i, 0)),
            scratch_shapes=[pltpu.VMEM((tm, c_in), jnp.float32)],
        ),
        compiler_params=_COMPILER_PARAMS,
        cost_estimate=pl.CostEstimate(flops=int(flops), transcendentals=0,
                                      bytes_accessed=int(bytes_accessed)),
    )(a, g, b_pre, w, b_post)


def _gcn_heads(a, h, w_heads, b_heads, alpha, noise, *, h4_pad, tm, tk):
    n_pad = a.shape[0]
    c_in = h.shape[1]
    c_heads = w_heads.shape[1]          # 2 * h4_pad
    grid = (n_pad // tm, n_pad // tk)
    h_spec, h_res = _g_operand_spec(n_pad, c_in, h.dtype, tk)
    kernel = functools.partial(_head_kernel, tk=tk, h_resident=h_res,
                               h4_pad=h4_pad)
    flops = 2 * n_pad * n_pad * c_in + 2 * n_pad * c_in * c_heads
    bytes_accessed = (a.size * a.dtype.itemsize
                      + (1 if h_res else grid[0]) * h.size * h.dtype.itemsize
                      + w_heads.size * w_heads.dtype.itemsize
                      + noise.size * noise.dtype.itemsize
                      + 3 * n_pad * h4_pad * 4)
    out_shape = (jax.ShapeDtypeStruct((n_pad, h4_pad), jnp.float32),   # z
                 jax.ShapeDtypeStruct((n_pad, h4_pad), jnp.float32),   # mu
                 jax.ShapeDtypeStruct((n_pad, h4_pad), jnp.float32))   # logvar
    return pl.pallas_call(
        kernel,
        out_shape=out_shape,
        grid_spec=pltpu.PrefetchScalarGridSpec(
            num_scalar_prefetch=0,
            grid=grid,
            in_specs=[
                pl.BlockSpec((tm, tk), lambda i, k: (i, k)),           # A tile
                h_spec,                                                # H3
                pl.BlockSpec((c_in, c_heads), lambda i, k: (0, 0)),    # [Wmu | Wlv]
                pl.BlockSpec((1, c_heads), lambda i, k: (0, 0)),       # [bmu | blv]
                pl.BlockSpec((1, h4_pad), lambda i, k: (0, 0)),        # alpha
                pl.BlockSpec((tm, h4_pad), lambda i, k: (i, 0)),       # noise
            ],
            out_specs=(
                pl.BlockSpec((tm, h4_pad), lambda i, k: (i, 0)),
                pl.BlockSpec((tm, h4_pad), lambda i, k: (i, 0)),
                pl.BlockSpec((tm, h4_pad), lambda i, k: (i, 0)),
            ),
            scratch_shapes=[pltpu.VMEM((tm, c_in), jnp.float32)],
        ),
        compiler_params=_COMPILER_PARAMS,
        cost_estimate=pl.CostEstimate(flops=int(flops),
                                      transcendentals=int(n_pad * h4_pad),
                                      bytes_accessed=int(bytes_accessed)),
    )(a, h, w_heads, b_heads, alpha, noise)


# ----------------------------------------------------------------------------
# JAX glue
# ----------------------------------------------------------------------------
def gcn_norm_dense(edge_index, edge_weight, num_nodes):
    """Dense D^{-1/2} (A + I) D^{-1/2}, matching PyG gcn_norm semantics."""
    row, col = edge_index[0], edge_index[1]                 # source, target
    a = jnp.zeros((num_nodes, num_nodes), jnp.float32)
    a = a.at[col, row].add(edge_weight)                     # message row -> col
    a = a + jnp.eye(num_nodes, dtype=jnp.float32)           # self loops, weight 1
    deg = a.sum(axis=1)
    dinv = jnp.where(deg > 0, jax.lax.rsqrt(deg), 0.0)
    return dinv[:, None] * a * dinv[None, :]


def _pad2(m, rows, cols, dtype):
    m = m.astype(dtype)                                      # cast BEFORE padding
    return jnp.pad(m, ((0, rows - m.shape[0]), (0, cols - m.shape[1])))


def encoder_forward(x, edge_index, edge_weight, params, noise, *, tm=512, tk=1024):
    n, c_in = x.shape
    h2 = params["w2"].shape[1]
    h3 = params["w3"].shape[1]
    h4 = params["w_mu"].shape[1]

    tm_eff, tk_eff, n_pad = _pick_tiles(n, tm, tk)
    c_in_p = _round_up(c_in, LANES)
    h2_p = _round_up(h2, LANES)
    h3_p = _round_up(h3, LANES)
    h4_p = _round_up(h4, LANES)

    # Dense normalized adjacency, cast to bf16 BEFORE padding (no f32 padded copy).
    # TODO(synk): for large sparse graphs (N^2 >> E) replace the dense A_hat with
    # a CSR gather/segment-sum kernel via PrefetchScalarGridSpec; optionally
    # quantize the streamed A to fp8 on v7x.
    a_hat = gcn_norm_dense(edge_index, edge_weight, n)
    a_p = _pad2(a_hat, n_pad, n_pad, jnp.bfloat16)

    # Fold the layer-1 and layer-2 projections (exact: no nonlinearity between
    # convs):  A (A X W1 + b1) W2 + b2 = A (A X (W1 W2) + b1 W2) + b2
    w12 = params["w1"] @ params["w2"]                        # [c_in, h2]  (f32)
    b12 = params["b1"][None, :] @ params["w2"]               # [1, h2]     (f32)
    b12_p = _pad2(b12, 1, h2_p, jnp.float32)

    # Pass 1: aggregate the narrower operand.
    if h2_p <= c_in_p:
        # Project first (cheap O(N*c_in*h2), done in f32 by XLA), then aggregate
        # the h2_p-wide G1:  G2 = A @ (X @ W12) + b12
        g1_p = _pad2(x @ w12, n_pad, h2_p, jnp.bfloat16)
        g2 = _gcn_agg_bias(a_p, g1_p, b12_p, out_dtype=jnp.bfloat16,
                           tm=tm_eff, tk=tk_eff)
    else:
        # Narrow input features: aggregate X then project in the finalize.
        x_p = _pad2(x, n_pad, c_in_p, jnp.bfloat16)
        w12_p = _pad2(w12, c_in_p, h2_p, jnp.float32)
        zeros_pre = jnp.zeros((1, c_in_p), jnp.float32)
        g2 = _gcn_agg_proj(a_p, x_p, zeros_pre, w12_p, b12_p,
                           out_dtype=jnp.bfloat16, tm=tm_eff, tk=tk_eff)

    # Pass 2: fold W3 into the finalize so pass 3 aggregates h3-wide (not h2):
    #   G3 = (A @ G2 + b2) @ W3
    b2_p = _pad2(params["b2"][None, :], 1, h2_p, jnp.float32)
    w3_p = _pad2(params["w3"], h2_p, h3_p, jnp.float32)
    zeros_h3 = jnp.zeros((1, h3_p), jnp.float32)
    g3 = _gcn_agg_proj(a_p, g2, b2_p, w3_p, zeros_h3,
                       out_dtype=jnp.bfloat16, tm=tm_eff, tk=tk_eff)

    # Pass 3: H3 = A @ G3 + b3
    b3_p = _pad2(params["b3"][None, :], 1, h3_p, jnp.float32)
    h3_ = _gcn_agg_bias(a_p, g3, b3_p, out_dtype=jnp.bfloat16,
                        tm=tm_eff, tk=tk_eff)

    # Pass 4: fused mu/logvar heads (shared aggregation, concatenated weights),
    # reparameterize and PReLU.
    w_heads = jnp.concatenate(
        [_pad2(params["w_mu"], h3_p, h4_p, jnp.float32),
         _pad2(params["w_lv"], h3_p, h4_p, jnp.float32)], axis=1)
    b_heads = jnp.concatenate(
        [_pad2(params["b_mu"][None, :], 1, h4_p, jnp.float32),
         _pad2(params["b_lv"][None, :], 1, h4_p, jnp.float32)], axis=1)
    alpha_p = _pad2(params["alpha"][None, :], 1, h4_p, jnp.float32)
    noise_p = _pad2(noise, n_pad, h4_p, jnp.float32)

    z_p, mu_p, lv_p = _gcn_heads(a_p, h3_, w_heads, b_heads, alpha_p, noise_p,
                                 h4_pad=h4_p, tm=tm_eff, tk=tk_eff)

    return z_p[:n, :h4], mu_p[:n, :h4], lv_p[:n, :h4]


# ----------------------------------------------------------------------------
# Parameter init (Glorot weights, zero biases, PReLU alpha = 0.25)
# ----------------------------------------------------------------------------
def glorot(key, fan_in, fan_out):
    limit = jnp.sqrt(6.0 / (fan_in + fan_out))
    return jax.random.uniform(key, (fan_in, fan_out), jnp.float32, -limit, limit)


def init_params(key, in_channels, hidden_channels):
    h1 = hidden_channels * 8
    h2 = hidden_channels * 4
    h3 = hidden_channels * 2
    h4 = hidden_channels
    ks = jax.random.split(key, 5)
    return {
        "w1": glorot(ks[0], in_channels, h1), "b1": jnp.zeros((h1,), jnp.float32),
        "w2": glorot(ks[1], h1, h2),          "b2": jnp.zeros((h2,), jnp.float32),
        "w3": glorot(ks[2], h2, h3),          "b3": jnp.zeros((h3,), jnp.float32),
        "w_mu": glorot(ks[3], h3, h4),        "b_mu": jnp.zeros((h4,), jnp.float32),
        "w_lv": glorot(ks[4], h3, h4),        "b_lv": jnp.zeros((h4,), jnp.float32),
        "alpha": jnp.full((h4,), 0.25, jnp.float32),
    }


# Pure-JAX f32 reference (layer-by-layer, mirrors the PyTorch forward).
def reference_forward(x, edge_index, edge_weight, params, noise):
    a = gcn_norm_dense(edge_index, edge_weight, x.shape[0])

    def conv(h, w, b):
        return a @ (h @ w) + b[None, :]

    h = conv(x, params["w1"], params["b1"])
    h = conv(h, params["w2"], params["b2"])
    h = conv(h, params["w3"], params["b3"])
    mu = conv(h, params["w_mu"], params["b_mu"])
    lv = conv(h, params["w_lv"], params["b_lv"])
    z = mu + noise * jnp.exp(0.5 * jnp.minimum(lv, MAX_LOGSTD))
    z = jnp.where(z >= 0.0, z, params["alpha"][None, :] * z)
    return z, mu, lv


if __name__ == "__main__":
    key = jax.random.PRNGKey(0)
    k_x, k_src, k_dst, k_w, k_p, k_n = jax.random.split(key, 6)

    num_nodes = 16
    in_channels = 16
    hidden_channels = 32
    num_edges = 48

    x = jax.random.normal(k_x, (num_nodes, in_channels), jnp.float32)
    src = jax.random.randint(k_src, (num_edges,), 0, num_nodes)
    dst = jax.random.randint(k_dst, (num_edges,), 0, num_nodes)
    edge_index = jnp.stack([src, dst], axis=0)                 # [2, E]
    edge_weight = jax.random.uniform(k_w, (num_edges,), jnp.float32, 0.1, 1.0)

    params = init_params(k_p, in_channels, hidden_channels)
    # reparameterization noise (torch.randn_like equivalent, deterministic here)
    noise = jax.random.normal(k_n, (num_nodes, hidden_channels), jnp.float32)

    z, mu, logvar = encoder_forward(x, edge_index, edge_weight, params, noise)
    jax.block_until_ready((z, mu, logvar))

    assert z.shape == (num_nodes, hidden_channels)
    assert mu.shape == (num_nodes, hidden_channels)
    assert logvar.shape == (num_nodes, hidden_channels)
    assert bool(jnp.all(jnp.isfinite(z)))
    assert bool(jnp.all(jnp.isfinite(mu)))
    assert bool(jnp.all(jnp.isfinite(logvar)))

    # Correctness vs pure-f32 reference (kernel streams bf16 A/activations,
    # accumulates and projects in f32 -> loose but meaningful tolerance).
    z_ref, mu_ref, lv_ref = reference_forward(x, edge_index, edge_weight,
                                              params, noise)
    assert bool(jnp.allclose(mu, mu_ref, atol=5e-2, rtol=5e-2))
    assert bool(jnp.allclose(logvar, lv_ref, atol=5e-2, rtol=5e-2))
    assert bool(jnp.allclose(z, z_ref, atol=5e-2, rtol=5e-2))

    print("KERNEL_OK")
</pallas_src>

<mosaic_0001>
module attributes {stable_mosaic.version = 11 : i64} {
  func.func @_agg_bias_kernel(%arg0: i32, %arg1: i32, %arg2: memref<64x128xbf16, #tpu.memory_space<vmem>>, %arg3: memref<128x128xbf16, #tpu.memory_space<vmem>>, %arg4: memref<1x128xf32, #tpu.memory_space<vmem>>, %arg5: memref<64x128xbf16, #tpu.memory_space<vmem>>, %arg6: memref<64x128xf32, #tpu.memory_space<vmem>>) attributes {dimension_semantics = [#tpu.dimension_semantics<parallel>, #tpu.dimension_semantics<arbitrary>], iteration_bounds = array<i64: 2, 1>, scalar_prefetch = 0 : i64, scratch_operands = 1 : i64, tpu.core_type = #tpu.core_type<tc>, window_params = [{transform_indices = @transform_0, window_bounds = array<i64: 64, 128>}, {pipeline_mode = #tpu.pipeline_mode<synchronous>, transform_indices = @transform_1, window_bounds = array<i64: 128, 128>}, {pipeline_mode = #tpu.pipeline_mode<synchronous>, transform_indices = @transform_2, window_bounds = array<i64: 1, 128>}, {transform_indices = @transform_3, window_bounds = array<i64: 64, 128>}]} {
    %c0_i32 = arith.constant 0 : i32
    %0 = arith.cmpi eq, %arg1, %c0_i32 : i32
    %1 = arith.extui %0 : i1 to i32
    %c0_i32_0 = arith.constant 0 : i32
    %2 = arith.cmpi ne, %1, %c0_i32_0 : i32
    scf.if %2 {
      %cst_9 = arith.constant 0.000000e+00 : f32
      %15 = vector.broadcast %cst_9 : f32 to vector<64x128xf32>
      %c0_10 = arith.constant 0 : index
      %c0_11 = arith.constant 0 : index
      %16 = vector.load %arg6[%c0_10, %c0_11] : memref<64x128xf32, #tpu.memory_space<vmem>>, vector<64x128xf32>
      tpu.vector_store %arg6[%c0_10, %c0_11], %15 {strides = array<i32>} : memref<64x128xf32, #tpu.memory_space<vmem>>, vector<64x128xf32>,
    } else {
    }
    %c128_i32 = arith.constant 128 : i32
    %3 = arith.muli %arg1, %c128_i32 : i32
    %4 = tpu.assume_multiple %3, 128 : i32
    %5 = arith.index_cast %4 : i32 to index
    %c0 = arith.constant 0 : index
    %6 = vector.load %arg3[%5, %c0] : memref<128x128xbf16, #tpu.memory_space<vmem>>, vector<128x128xbf16>
    %c0_1 = arith.constant 0 : index
    %c0_2 = arith.constant 0 : index
    %7 = vector.load %arg6[%c0_1, %c0_2] : memref<64x128xf32, #tpu.memory_space<vmem>>, vector<64x128xf32>
    %c0_3 = arith.constant 0 : index
    %c0_4 = arith.constant 0 : index
    %8 = vector.load %arg2[%c0_3, %c0_4] : memref<64x128xbf16, #tpu.memory_space<vmem>>, vector<64x128xbf16>
    %cst = arith.constant dense<0.000000e+00> : vector<64x128xf32>
    %9 = tpu.matmul %8, %6, %cst {dimension_numbers = #tpu.dot_dimension_numbers<[1], [0], [0], [1], [0, 0, 1, 1], [], []>} : vector<64x128xbf16>, vector<128x128xbf16>, vector<64x128xf32> -> vector<64x128xf32>
    %10 = arith.addf %7, %9 : vector<64x128xf32>
    %c0_5 = arith.constant 0 : index
    %c0_6 = arith.constant 0 : index
    %11 = vector.load %arg6[%c0_5, %c0_6] : memref<64x128xf32, #tpu.memory_space<vmem>>, vector<64x128xf32>
    tpu.vector_store %arg6[%c0_5, %c0_6], %10 {strides = array<i32>} : memref<64x128xf32, #tpu.memory_space<vmem>>, vector<64x128xf32>,
    %c0_i32_7 = arith.constant 0 : i32
    %12 = arith.cmpi eq, %arg1, %c0_i32_7 : i32
    %13 = arith.extui %12 : i1 to i32
    %c0_i32_8 = arith.constant 0 : i32
    %14 = arith.cmpi ne, %13, %c0_i32_8 : i32
    scf.if %14 {
      %c0_9 = arith.constant 0 : index
      %c0_10 = arith.constant 0 : index
      %15 = vector.load %arg6[%c0_9, %c0_10] : memref<64x128xf32, #tpu.memory_space<vmem>>, vector<64x128xf32>
      %c0_11 = arith.constant 0 : index
      %c0_12 = arith.constant 0 : index
      %16 = vector.load %arg4[%c0_11, %c0_12] : memref<1x128xf32, #tpu.memory_space<vmem>>, vector<1x128xf32>
      %17 = vector.broadcast %16 : vector<1x128xf32> to vector<64x128xf32>
      %18 = arith.addf %15, %17 : vector<64x128xf32>
      %19 = arith.truncf %18 : vector<64x128xf32> to vector<64x128xbf16>
      %c0_13 = arith.constant 0 : index
      %c0_14 = arith.constant 0 : index
      %20 = vector.load %arg5[%c0_13, %c0_14] : memref<64x128xbf16, #tpu.memory_space<vmem>>, vector<64x128xbf16>
      tpu.vector_store %arg5[%c0_13, %c0_14], %19 {strides = array<i32>} : memref<64x128xbf16, #tpu.memory_space<vmem>>, vector<64x128xbf16>,
    } else {
    }
    return
  }
  func.func @transform_0(%arg0: i32, %arg1: i32) -> (i32, i32) {
    %c0_i32 = arith.constant 0 : i32
    return %arg0, %arg1 : i32, i32
  }
  func.func @transform_1(%arg0: i32, %arg1: i32) -> (i32, i32) {
    %c0_i32 = arith.constant 0 : i32
    %c0_i32_0 = arith.constant 0 : i32
    %c0_i32_1 = arith.constant 0 : i32
    return %c0_i32, %c0_i32_0 : i32, i32
  }
  func.func @transform_2(%arg0: i32, %arg1: i32) -> (i32, i32) {
    %c0_i32 = arith.constant 0 : i32
    %c0_i32_0 = arith.constant 0 : i32
    %c0_i32_1 = arith.constant 0 : i32
    return %c0_i32, %c0_i32_0 : i32, i32
  }
  func.func @transform_3(%arg0: i32, %arg1: i32) -> (i32, i32) {
    %c0_i32 = arith.constant 0 : i32
    %c0_i32_0 = arith.constant 0 : i32
    return %arg0, %c0_i32 : i32, i32
  }
}

</mosaic_0001>

<llo_original>
// kernel: tpu_custom_call.1
$region0: #{tpu_custom_call.1}
  #allocation0 [shape = 'u32[]', space=smem, size = 0x4, offset = 0x4, fixed_abs, tag = 'smem constant byte address 0x4 - core index']
  #allocation1 [shape = 'u32[144,128]{1,0:T(1,128)}', space=vmem, size = 0x12000, scoped, tag = 'internal scratch']
  #allocation2 [shape = 'f32[64,128]{1,0:T(8,128)}', space=vmem, size = 0x8000, scoped, tag = 'scratch operand']
  %s0 = inlined_call_operand.hbm [shape: bf16[128,128], index: 0, kind: input, shape index: {}]
  %s1 = inlined_call_operand.hbm [shape: bf16[128,128], index: 1, kind: input, shape index: {}]
  %s2 = inlined_call_operand.vmem [shape: f32[1,128], index: 2, kind: input, shape index: {}]
  %s3 = inlined_call_operand.hbm [shape: bf16[128,128], index: 3, kind: output, shape index: {}]
  %s4 = sld [smem:[#allocation0]]
  $region61: #{tpu_custom_call.1} parent=0
    _
  %s6 = ssub.s32 1, %s4
  %s7 = scalar_select 0, %s6, %s4
  $region1: #{tpu_custom_call.1} parent=0
    #allocation3 [shape = 'u8[32768]{0}', space=vmem, size = 0x8000, scoped, tag = 'input window, operand 0']
    #allocation4 [shape = 's32[2]{0}', space=sflag, size = 0x8, scoped, tag = 'scoped memory for tpu_custom_call.1']
    #allocation5 [shape = 's32[2]{0}', space=sflag, size = 0x8, scoped, tag = 'scoped memory for tpu_custom_call.1']
    #allocation6 [shape = 'u8[32768]{0}', space=vmem, size = 0x8000, scoped, tag = 'input window, operand 1, single buffered']
    #allocation7 [shape = 's32[1]{0}', space=sflag, size = 0x4, scoped, tag = 'scoped memory for tpu_custom_call.1']
    #allocation8 [shape = 'u8[32768]{0}', space=vmem, size = 0x8000, scoped, tag = 'output window, operand 0']
    %8 = vsyncpa [#allocation4], 0
    %s9 = scalar_lea.sflag [#allocation4], 1
    %10 = vsyncpa %s9, 0
    %11 = vsyncpa [#allocation7], 0
    %12 = vsyncpa [#allocation5], 0
    %s13 = scalar_lea.sflag [#allocation5], 1
    %14 = vsyncpa %s13, 0
    loop: start=0, step=1, limit=4
    $region2: #{tpu_custom_call.1} parent=1 // loop_pre_header
      _
    $region3: #{tpu_custom_call.1} parent=1 // loop_header
      %s16 = sphi 0, %s20
      %p17 = scmp.ge.s32.totalorder %s16, 4
      %s23 = sphi 0, %s35
      %s24 = sphi 0, %s31
      %s25 = sphi 0, %s23
      %s26 = sphi 0, %s24
      %s27 = sphi 0, %s25
      %s28 = sphi 0, %s26
      %s40 = sphi 0, %s42
      %s43 = sphi 0, %s40
      %s44 = sphi 0, %s43
      %s60 = sphi 0, %s44
      %s64 = sphi 0, %s64
      %s66 = sphi 0, %s64
      %s67 = sphi 0, %s66
      %s81 = sphi 0, %s67
      %s85 = sphi 0, %s85
      %s87 = sphi 0, %s85
      %s88 = sphi 0, %s87
      %s102 = sphi 0, %s88
      %s108 = sphi 0, %s110
      %s111 = sphi 0, %s108
      %s112 = sphi 0, %s111
      %s128 = sphi 0, %s112
    $region4: #{tpu_custom_call.1} parent=1 // loop_header_branch
      %19 = sbr.rel (%p17) target = $region8
    $region5: #{tpu_custom_call.1} parent=1 // loop_body
      %s21 = ssub.s32 %s16, 1
      %s22 = ssub.s32 %s16, 2
      %s29 = sadd.s32 1, %s24
      %p30 = scmp.ge.s32.totalorder %s29, 1
      %s31 = scalar_select %p30, 0, %s29
      %s32 = sadd.s32 1, %s23
      %s33 = scalar_select %p30, %s32, %s23
      %p34 = scmp.ge.s32.totalorder %s33, 2
      %s35 = scalar_select %p34, 0, %s33
      %s36 = ssub.s32 %s23, %s35
      %s37 = ssub.s32 %s24, %s31
      %s38 = sor.u32 %s36, %s37
      %p39 = scmp.eq.s32.totalorder %s38, 0
      %s41 = sadd.s32 %s40, 1
      %s42 = scalar_select %p39, %s40, %s41
      %p45 = pneg %p39
      %p46 = scmp.eq.s32.totalorder %s16, 1
      %p47 = por %p45, %p46
      %p48 = scmp.ne.s32.totalorder %s40, %s43
      %p49 = scmp.eq.s32.totalorder %s16, 0
      %p50 = por %p48, %p49
      %p51 = scmp.ne.s32.totalorder %s40, %s43
      %p52 = scmp.eq.s32.totalorder %s21, 1
      %p53 = por %p51, %p52
      %p54 = scmp.ne.s32.totalorder %s43, %s44
      %p55 = scmp.eq.s32.totalorder %s21, 0
      %p56 = por %p54, %p55
      %p57 = scmp.ne.s32.totalorder %s43, %s44
      %p58 = scmp.eq.s32.totalorder %s22, 1
      %p59 = por %p57, %p58
      %p61 = scmp.ne.s32.totalorder %s44, %s60
      %p62 = scmp.eq.s32.totalorder %s22, 0
      %p63 = por %p61, %p62
      %s65 = sadd.s32 %s64, 1
      %p68 = scmp.eq.s32.totalorder %s16, 1
      %p69 = scmp.ne.s32.totalorder %s64, %s66
      %p70 = scmp.eq.s32.totalorder %s16, 0
      %p71 = por %p69, %p70
      %p72 = scmp.ne.s32.totalorder %s64, %s66
      %p73 = scmp.eq.s32.totalorder %s21, 1
      %p74 = por %p72, %p73
      %p75 = scmp.ne.s32.totalorder %s66, %s67
      %p76 = scmp.eq.s32.totalorder %s21, 0
      %p77 = por %p75, %p76
      %p78 = scmp.ne.s32.totalorder %s66, %s67
      %p79 = scmp.eq.s32.totalorder %s22, 1
      %p80 = por %p78, %p79
      %p82 = scmp.ne.s32.totalorder %s67, %s81
      %p83 = scmp.eq.s32.totalorder %s22, 0
      %p84 = por %p82, %p83
      %s86 = sadd.s32 %s85, 1
      %p89 = scmp.eq.s32.totalorder %s16, 1
      %p90 = scmp.ne.s32.totalorder %s85, %s87
      %p91 = scmp.eq.s32.totalorder %s16, 0
      %p92 = por %p90, %p91
      %p93 = scmp.ne.s32.totalorder %s85, %s87
      %p94 = scmp.eq.s32.totalorder %s21, 1
      %p95 = por %p93, %p94
      %p96 = scmp.ne.s32.totalorder %s87, %s88
      %p97 = scmp.eq.s32.totalorder %s21, 0
      %p98 = por %p96, %p97
      %p99 = scmp.ne.s32.totalorder %s87, %s88
      %p100 = scmp.eq.s32.totalorder %s22, 1
      %p101 = por %p99, %p100
      %p103 = scmp.ne.s32.totalorder %s88, %s102
      %p104 = scmp.eq.s32.totalorder %s22, 0
      %p105 = por %p103, %p104
      %s106 = ssub.s32 %s23, %s35
      %p107 = scmp.eq.s32.totalorder %s106, 0
      %s109 = sadd.s32 %s108, 1
      %s110 = scalar_select %p107, %s108, %s109
      %p113 = pneg %p107
      %p114 = scmp.eq.s32.totalorder %s16, 1
      %p115 = por %p113, %p114
      %p116 = scmp.ne.s32.totalorder %s108, %s111
      %p117 = scmp.eq.s32.totalorder %s16, 0
      %p118 = por %p116, %p117
      %p119 = scmp.ne.s32.totalorder %s108, %s111
      %p120 = scmp.eq.s32.totalorder %s21, 1
      %p121 = por %p119, %p120
      %p122 = scmp.ne.s32.totalorder %s111, %s112
      %p123 = scmp.eq.s32.totalorder %s21, 0
      %p124 = por %p122, %p123
      %p125 = scmp.ne.s32.totalorder %s111, %s112
      %p126 = scmp.eq.s32.totalorder %s22, 1
      %p127 = por %p125, %p126
      %p129 = scmp.ne.s32.totalorder %s112, %s128
      %p130 = scmp.eq.s32.totalorder %s22, 0
      %p131 = por %p129, %p130
      %p132 = scmp.le.s32.totalorder 1, %s16
      %p133 = scmp.lt.s32.totalorder %s16, 3
      %p134 = pnand %p132, %p133
      %p135 = pneg %p134
      // Predicated region
      $region9: #{tpu_custom_call.1} parent=5 // pred_check
        _
      $region10: #{tpu_custom_call.1} parent=5 // pred_check_branch
        %137 = sbr.rel (%p134) target = $region12
      $region11: #{tpu_custom_call.1} parent=5 // pred_region
        %s138 = ssub.s32 %s16, 1
        // Predicated region
        $region13: #{tpu_custom_call.1} parent=11 // pred_check
          %p139 = pneg %p77
        $region14: #{tpu_custom_call.1} parent=11 // pred_check_branch
          %141 = sbr.rel (%p139) target = $region16
        $region15: #{tpu_custom_call.1} parent=11 // pred_region
          %s143 = ssub.s32 1024, 1024
          %144 = vsyncadd [#allocation7], %s143
          %s145 = sshll.u32 [#allocation6], 4
          %s146 = int_to_ptr.vmem [resolvable:$true] %s145
          %151 = dma.hbm_to_vmem [thread:$0]  %s1, 1024, %s146, [#allocation7], 64, 64, 4
        $region16: #{tpu_custom_call.1} parent=11 // pred_fallthru
          _
        // Predicated region
        $region17: #{tpu_custom_call.1} parent=11 // pred_check
          %p152 = pneg %p98
        $region18: #{tpu_custom_call.1} parent=11 // pred_check_branch
          %154 = sbr.rel (%p152) target = $region20
        $region19: #{tpu_custom_call.1} parent=11 // pred_region
          _
        $region20: #{tpu_custom_call.1} parent=11 // pred_fallthru
          _
      $region12: #{tpu_custom_call.1} parent=5 // pred_fallthru
        _
      %p155 = scmp.lt.s32.totalorder %s16, 2
      // Predicated region
      $region21: #{tpu_custom_call.1} parent=5 // pred_check
        %p156 = pneg %p155
      $region22: #{tpu_custom_call.1} parent=5 // pred_check_branch
        %158 = sbr.rel (%p156) target = $region24
      $region23: #{tpu_custom_call.1} parent=5 // pred_region
        // Predicated region
        $region25: #{tpu_custom_call.1} parent=23 // pred_check
          %p159 = pneg %p50
        $region26: #{tpu_custom_call.1} parent=23 // pred_check_branch
          %161 = sbr.rel (%p159) target = $region28
        $region27: #{tpu_custom_call.1} parent=23 // pred_region
          %s162 = sand.u32 %s40, 1
          %s163 = scalar_lea.sflag [#allocation4], %s162
          %s164 = sand.u32 %s40, 1
          %s165 = smul.addr %s164, 32
          %s166 = scalar_lea.vmem [#allocation3], %s165
          %s167 = smul.u32 8, %s23
          %s169 = ssub.s32 512, 512
          %170 = vsyncadd %s163, %s169
          %s171 = sadd.s32 %s24, %s167
          %s172 = smul.addr %s171, 64
          %s173 = scalar_lea.hbm %s0, %s172
          %s174 = sshll.u32 %s166, 4
          %s175 = int_to_ptr.vmem [resolvable:$true] %s174
          %180 = dma.hbm_to_vmem [thread:$0]  %s173, 512, %s175, %s163, 64, 64, 4
        $region28: #{tpu_custom_call.1} parent=23 // pred_fallthru
          _
      $region24: #{tpu_custom_call.1} parent=5 // pred_fallthru
        _
      %p181 = scmp.le.s32.totalorder 1, %s16
      %p182 = scmp.lt.s32.totalorder %s16, 3
      %p183 = pnand %p181, %p182
      %p184 = pneg %p183
      // Predicated region
      $region29: #{tpu_custom_call.1} parent=5 // pred_check
        _
      $region30: #{tpu_custom_call.1} parent=5 // pred_check_branch
        %186 = sbr.rel (%p183) target = $region32
      $region31: #{tpu_custom_call.1} parent=5 // pred_region
        %s187 = ssub.s32 %s16, 1
        %s188 = sand.u32 %s43, 1
        %s189 = scalar_lea.sflag [#allocation4], %s188
        %s190 = sand.u32 %s43, 1
        %s191 = smul.addr %s190, 32
        %s192 = scalar_lea.vmem [#allocation3], %s191
        // Predicated region
        $region33: #{tpu_custom_call.1} parent=31 // pred_check
          %p193 = pneg %p56
        $region34: #{tpu_custom_call.1} parent=31 // pred_check_branch
          %195 = sbr.rel (%p193) target = $region36
        $region35: #{tpu_custom_call.1} parent=31 // pred_region
          %196 = dma.done %s189, 512
        $region36: #{tpu_custom_call.1} parent=31 // pred_fallthru
          _
        // Predicated region
        $region37: #{tpu_custom_call.1} parent=31 // pred_check
          %p197 = pneg %p77
        $region38: #{tpu_custom_call.1} parent=31 // pred_check_branch
          %199 = sbr.rel (%p197) target = $region40
        $region39: #{tpu_custom_call.1} parent=31 // pred_region
          %200 = dma.done [#allocation7], 1024
        $region40: #{tpu_custom_call.1} parent=31 // pred_fallthru
          _
        %s201 = sand.u32 %s43, 1
        %s202 = scalar_lea.sflag [#allocation4], %s201
        %s203 = sand.u32 %s43, 1
        %s204 = smul.addr %s203, 32
        %s205 = scalar_lea.vmem [#allocation3], %s204
        %p206 = pneg %p56
        %p207 = pneg %p53
        %p208 = pneg %p77
        %p209 = pneg %p74
        %p210 = pneg %p98
        %p211 = pneg %p95
        %p212 = pneg %p124
        %p213 = pneg %p121
        %s214 = sand.u32 %s111, 1
        %s215 = scalar_lea.sflag [#allocation5], %s214
        %s216 = sand.u32 %s111, 1
        %s217 = smul.addr %s216, 32
        %s218 = scalar_lea.vmem [#allocation8], %s217
        %s219 = smul.u32 8, %s25
        %s220 = smul.u32 8, %s25
        %p222 = scmp.eq.s32.totalorder %s26, 0
        // Predicated region
        $region41: #{tpu_custom_call.1} parent=31 // pred_check
          %p223 = pneg %p222
        $region42: #{tpu_custom_call.1} parent=31 // pred_check_branch
          %225 = sbr.rel (%p223) target = $region44
        $region43: #{tpu_custom_call.1} parent=31 // pred_region
          %226 = vst [vmem:[#allocation2] sm:$0xff] 0.0
          %227 = vst [vmem:[#allocation2 + $0x8] sm:$0xff] 0.0
          %228 = vst [vmem:[#allocation2 + $0x10] sm:$0xff] 0.0
          %229 = vst [vmem:[#allocation2 + $0x18] sm:$0xff] 0.0
          %230 = vst [vmem:[#allocation2 + $0x20] sm:$0xff] 0.0
          %231 = vst [vmem:[#allocation2 + $0x28] sm:$0xff] 0.0
          %232 = vst [vmem:[#allocation2 + $0x30] sm:$0xff] 0.0
          %233 = vst [vmem:[#allocation2 + $0x38] sm:$0xff] 0.0
        $region44: #{tpu_custom_call.1} parent=31 // pred_fallthru
          _
        %s234 = smul.u32 %s26, 128
        %s235 = sshra.s32 %s234, 3
        %s236 = sand.u32 %s234, 7
        %s237 = smul.addr %s235, 4
        %s238 = scalar_lea.vmem [#allocation6], %s237
        %v239 = vld [vmem:[%s238] sm:$0xf]
        %v240 = vld [vmem:[%s238 + $0x4] sm:$0xf]
        %v241 = vld [vmem:[%s238 + $0x8] sm:$0xf]
        %v242 = vld [vmem:[%s238 + $0xc] sm:$0xf]
        %v243 = vld [vmem:[%s238 + $0x10] sm:$0xf]
        %v244 = vld [vmem:[%s238 + $0x14] sm:$0xf]
        %v245 = vld [vmem:[%s238 + $0x18] sm:$0xf]
        %v246 = vld [vmem:[%s238 + $0x1c] sm:$0xf]
        %v247 = vld [vmem:[%s238 + $0x20] sm:$0xf]
        %v248 = vld [vmem:[%s238 + $0x24] sm:$0xf]
        %v249 = vld [vmem:[%s238 + $0x28] sm:$0xf]
        %v250 = vld [vmem:[%s238 + $0x2c] sm:$0xf]
        %v251 = vld [vmem:[%s238 + $0x30] sm:$0xf]
        %v252 = vld [vmem:[%s238 + $0x34] sm:$0xf]
        %v253 = vld [vmem:[%s238 + $0x38] sm:$0xf]
        %v254 = vld [vmem:[%s238 + $0x3c] sm:$0xf]
        %v255 = vld [vmem:[#allocation2] sm:$0xff]
        %v256 = vld [vmem:[#allocation2 + $0x8] sm:$0xff]
        %v257 = vld [vmem:[#allocation2 + $0x10] sm:$0xff]
        %v258 = vld [vmem:[#allocation2 + $0x18] sm:$0xff]
        %v259 = vld [vmem:[#allocation2 + $0x20] sm:$0xff]
        %v260 = vld [vmem:[#allocation2 + $0x28] sm:$0xff]
        %v261 = vld [vmem:[#allocation2 + $0x30] sm:$0xff]
        %v262 = vld [vmem:[#allocation2 + $0x38] sm:$0xff]
        %v263 = vld [vmem:[%s192] sm:$0xf]
        %v264 = vld [vmem:[%s192 + $0x4] sm:$0xf]
        %v265 = vld [vmem:[%s192 + $0x8] sm:$0xf]
        %v266 = vld [vmem:[%s192 + $0xc] sm:$0xf]
        %v267 = vld [vmem:[%s192 + $0x10] sm:$0xf]
        %v268 = vld [vmem:[%s192 + $0x14] sm:$0xf]
        %v269 = vld [vmem:[%s192 + $0x18] sm:$0xf]
        %v270 = vld [vmem:[%s192 + $0x1c] sm:$0xf]
        %v279 = vunpack.c.l.b16 %v263
        %v280 = vunpack.c.l.b16 %v264
        %v281 = vunpack.c.l.b16 %v265
        %v282 = vunpack.c.l.b16 %v266
        %v283 = vunpack.c.l.b16 %v267
        %v284 = vunpack.c.l.b16 %v268
        %v285 = vunpack.c.l.b16 %v269
        %v286 = vunpack.c.l.b16 %v270
        %v287 = vpack.c.b16 %v280, %v279
        %v288 = vpack.c.b16 %v282, %v281
        %v289 = vpack.c.b16 %v284, %v283
        %v290 = vpack.c.b16 %v286, %v285
        %v311 = vunpack.c.l.b16 %v239
        %v312 = vunpack.c.l.b16 %v240
        %v313 = vunpack.c.l.b16 %v241
        %v314 = vunpack.c.l.b16 %v242
        %v315 = vunpack.c.l.b16 %v243
        %v316 = vunpack.c.l.b16 %v244
        %v317 = vunpack.c.l.b16 %v245
        %v318 = vunpack.c.l.b16 %v246
        %v319 = vunpack.c.l.b16 %v247
        %v320 = vunpack.c.l.b16 %v248
        %v321 = vunpack.c.l.b16 %v249
        %v322 = vunpack.c.l.b16 %v250
        %v323 = vunpack.c.l.b16 %v251
        %v324 = vunpack.c.l.b16 %v252
        %v325 = vunpack.c.l.b16 %v253
        %v326 = vunpack.c.l.b16 %v254
        %v327 = vpack.c.b16 %v312, %v311
        %v328 = vpack.c.b16 %v314, %v313
        %v329 = vpack.c.b16 %v316, %v315
        %v330 = vpack.c.b16 %v318, %v317
        %v331 = vpack.c.b16 %v320, %v319
        %v332 = vpack.c.b16 %v322, %v321
        %v333 = vpack.c.b16 %v324, %v323
        %v334 = vpack.c.b16 %v326, %v325
        %343 = vmatprep.subr.bf16.mxu0 0
        %344 = vmatpush1.bf16.msra.mxu0 %v327
        %345 = vmatprep.subr.bf16.mxu0 0
        %346 = vmatpush1.bf16.msra.mxu0 %v328
        %347 = vmatprep.subr.bf16.mxu0 0
        %348 = vmatpush1.bf16.msra.mxu0 %v329
        %349 = vmatprep.subr.bf16.mxu0 0
        %350 = vmatpush1.bf16.msra.mxu0 %v330
        %351 = vmatprep.subr.bf16.mxu0 0
        %352 = vmatpush1.bf16.msra.mxu0 %v331
        %353 = vmatprep.subr.bf16.mxu0 0
        %354 = vmatpush1.bf16.msra.mxu0 %v332
        %355 = vmatprep.subr.bf16.mxu0 0
        %356 = vmatpush1.bf16.msra.mxu0 %v333
        %357 = vmatprep.subr.bf16.mxu0 0
        %358 = vmatpush1.bf16.msra.mxu0 %v334
        %359 = vmatprep.subr.bf16.mxu0 0
        %360 = vmatpush1.bf16.msra.mxu0 0
        %361 = vmatprep.subr.bf16.mxu0 0
        %362 = vmatpush1.bf16.msra.mxu0 0
        %363 = vmatprep.subr.bf16.mxu0 0
        %364 = vmatpush1.bf16.msra.mxu0 0
        %365 = vmatprep.subr.bf16.mxu0 0
        %366 = vmatpush1.bf16.msra.mxu0 0
        %367 = vmatprep.subr.bf16.mxu0 0
        %368 = vmatpush1.bf16.msra.mxu0 0
        %369 = vmatprep.subr.bf16.mxu0 0
        %370 = vmatpush1.bf16.msra.mxu0 0
        %371 = vmatprep.subr.bf16.mxu0 0
        %372 = vmatpush1.bf16.msra.mxu0 0
        %373 = vmatprep.subr.bf16.mxu0 0
        %374 = vmatpush1.bf16.msra.mxu0 0
        %375 = vmatprep.mubr.bf16.mxu0 0
        %376 = vmatmul.mubr.bf16.gmra.mrb[0].mxu0 %v287
        %v377 = vpop.f32.mrb[0].mxu0
        %v378 = vadd.f32 0.0, %v377
        %v379 = vpop.f32.mrb[0].mxu0
        %v380 = vpop.f32.mrb[0].mxu0
        %v381 = vadd.f32 0.0, %v380
        %v382 = vpop.f32.mrb[0].mxu0
        %383 = vmatprep.mubr.bf16.mxu0 0
        %384 = vmatmul.mubr.bf16.gmra.mrb[0].mxu0 %v288
        %v385 = vpop.f32.mrb[0].mxu0
        %v386 = vadd.f32 0.0, %v385
        %v387 = vpop.f32.mrb[0].mxu0
        %v388 = vpop.f32.mrb[0].mxu0
        %v389 = vadd.f32 0.0, %v388
        %v390 = vpop.f32.mrb[0].mxu0
        %391 = vmatprep.mubr.bf16.mxu0 0
        %392 = vmatmul.mubr.bf16.gmra.mrb[0].mxu0 %v289
        %v393 = vpop.f32.mrb[0].mxu0
        %v394 = vadd.f32 0.0, %v393
        %v395 = vpop.f32.mrb[0].mxu0
        %v396 = vpop.f32.mrb[0].mxu0
        %v397 = vadd.f32 0.0, %v396
        %v398 = vpop.f32.mrb[0].mxu0
        %399 = vmatprep.mubr.bf16.mxu0 0
        %400 = vmatmul.mubr.bf16.gmra.mrb[0].mxu0 %v290
        %v401 = vpop.f32.mrb[0].mxu0
        %v402 = vadd.f32 0.0, %v401
        %v403 = vpop.f32.mrb[0].mxu0
        %v404 = vpop.f32.mrb[0].mxu0
        %v405 = vadd.f32 0.0, %v404
        %v406 = vpop.f32.mrb[0].mxu0
        %407 = vdwg.mxu0
        %v408 = vadd.f32 %v255, %v378
        %v409 = vadd.f32 %v256, %v381
        %v410 = vadd.f32 %v257, %v386
        %v411 = vadd.f32 %v258, %v389
        %v412 = vadd.f32 %v259, %v394
        %v413 = vadd.f32 %v260, %v397
        %v414 = vadd.f32 %v261, %v402
        %v415 = vadd.f32 %v262, %v405
        %416 = vst [vmem:[#allocation2] sm:$0xff] %v408
        %417 = vst [vmem:[#allocation2 + $0x8] sm:$0xff] %v409
        %418 = vst [vmem:[#allocation2 + $0x10] sm:$0xff] %v410
        %419 = vst [vmem:[#allocation2 + $0x18] sm:$0xff] %v411
        %420 = vst [vmem:[#allocation2 + $0x20] sm:$0xff] %v412
        %421 = vst [vmem:[#allocation2 + $0x28] sm:$0xff] %v413
        %422 = vst [vmem:[#allocation2 + $0x30] sm:$0xff] %v414
        %423 = vst [vmem:[#allocation2 + $0x38] sm:$0xff] %v415
        // Predicated region
        $region45: #{tpu_custom_call.1} parent=31 // pred_check
          %p424 = pneg %p222
        $region46: #{tpu_custom_call.1} parent=31 // pred_check_branch
          %426 = sbr.rel (%p424) target = $region48
        $region47: #{tpu_custom_call.1} parent=31 // pred_region
          %v427 = vld [vmem:[#allocation2] sm:$0xff]
          %v428 = vld [vmem:[#allocation2 + $0x8] sm:$0xff]
          %v429 = vld [vmem:[#allocation2 + $0x10] sm:$0xff]
          %v430 = vld [vmem:[#allocation2 + $0x18] sm:$0xff]
          %v431 = vld [vmem:[#allocation2 + $0x20] sm:$0xff]
          %v432 = vld [vmem:[#allocation2 + $0x28] sm:$0xff]
          %v433 = vld [vmem:[#allocation2 + $0x30] sm:$0xff]
          %v434 = vld [vmem:[#allocation2 + $0x38] sm:$0xff]
          %v435 = vld [vmem:[%s2] sm:$0x1]
          %v437 = vlaneseq
          %v438 = vshrl.u32 %v437, 7
          %v439 = vsub.s32 0, %v438
          %v440 = vrot.slane %v435, %v439
          %v442 = vadd.f32 %v427, %v440
          %v443 = vadd.f32 %v428, %v440
          %v444 = vadd.f32 %v429, %v440
          %v445 = vadd.f32 %v430, %v440
          %v446 = vadd.f32 %v431, %v440
          %v447 = vadd.f32 %v432, %v440
          %v448 = vadd.f32 %v433, %v440
          %v449 = vadd.f32 %v434, %v440
          %v450 = vpack.c.bf16 %v443, %v442
          %v451 = vpack.c.bf16 %v445, %v444
          %v452 = vpack.c.bf16 %v447, %v446
          %v453 = vpack.c.bf16 %v449, %v448
          %v458 = vunpack.c.l.b16 %v450
          %v459 = vunpack.c.h.b16 %v450
          %v460 = vunpack.c.l.b16 %v451
          %v461 = vunpack.c.h.b16 %v451
          %v462 = vunpack.c.l.b16 %v452
          %v463 = vunpack.c.h.b16 %v452
          %v464 = vunpack.c.l.b16 %v453
          %v465 = vunpack.c.h.b16 %v453
          %v466 = vpack.c.b16 %v458, %v458
          %v467 = vpack.c.b16 %v459, %v459
          %v468 = vpack.c.b16 %v460, %v460
          %v469 = vpack.c.b16 %v461, %v461
          %v470 = vpack.c.b16 %v462, %v462
          %v471 = vpack.c.b16 %v463, %v463
          %v472 = vpack.c.b16 %v464, %v464
          %v473 = vpack.c.b16 %v465, %v465
          %482 = vst [vmem:[%s218] sm:$0xf] %v466
          %483 = vst [vmem:[%s218 + $0x4] sm:$0xf] %v467
          %484 = vst [vmem:[%s218 + $0x8] sm:$0xf] %v468
          %485 = vst [vmem:[%s218 + $0xc] sm:$0xf] %v469
          %486 = vst [vmem:[%s218 + $0x10] sm:$0xf] %v470
          %487 = vst [vmem:[%s218 + $0x14] sm:$0xf] %v471
          %488 = vst [vmem:[%s218 + $0x18] sm:$0xf] %v472
          %489 = vst [vmem:[%s218 + $0x1c] sm:$0xf] %v473
        $region48: #{tpu_custom_call.1} parent=31 // pred_fallthru
          _
        %s490 = sand.u32 %s111, 1
        %s491 = scalar_lea.sflag [#allocation5], %s490
        %s492 = sand.u32 %s111, 1
        %s493 = smul.addr %s492, 32
        %s494 = scalar_lea.vmem [#allocation8], %s493
        // Predicated region
        $region49: #{tpu_custom_call.1} parent=31 // pred_check
          %p495 = pneg %p121
        $region50: #{tpu_custom_call.1} parent=31 // pred_check_branch
          %497 = sbr.rel (%p495) target = $region52
        $region51: #{tpu_custom_call.1} parent=31 // pred_region
          %s498 = smul.u32 8, %s25
          %s500 = ssub.s32 512, 512
          %501 = vsyncadd %s491, %s500
          %s502 = smul.addr %s498, 64
          %s503 = scalar_lea.hbm %s3, %s502
          %s504 = sshll.u32 %s494, 4
          %s505 = int_to_ptr.vmem [resolvable:$true] %s504
          %510 = dma.vmem_to_hbm [thread:$0]  %s505, 512, %s503, %s491, 64, 64, 4
        $region52: #{tpu_custom_call.1} parent=31 // pred_fallthru
          _
      $region32: #{tpu_custom_call.1} parent=5 // pred_fallthru
        _
      %p511 = scmp.le.s32.totalorder 2, %s16
      // Predicated region
      $region53: #{tpu_custom_call.1} parent=5 // pred_check
        %p512 = pneg %p511
      $region54: #{tpu_custom_call.1} parent=5 // pred_check_branch
        %514 = sbr.rel (%p512) target = $region56
      $region55: #{tpu_custom_call.1} parent=5 // pred_region
        %s515 = ssub.s32 %s16, 2
        // Predicated region
        $region57: #{tpu_custom_call.1} parent=55 // pred_check
          %p516 = pneg %p127
        $region58: #{tpu_custom_call.1} parent=55 // pred_check_branch
          %518 = sbr.rel (%p516) target = $region60
        $region59: #{tpu_custom_call.1} parent=55 // pred_region
          %s519 = sand.u32 %s112, 1
          %s520 = scalar_lea.sflag [#allocation5], %s519
          %s521 = sand.u32 %s112, 1
          %s522 = smul.addr %s521, 32
          %s523 = scalar_lea.vmem [#allocation8], %s522
          %524 = dma.done %s520, 512
        $region60: #{tpu_custom_call.1} parent=55 // pred_fallthru
          _
      $region56: #{tpu_custom_call.1} parent=5 // pred_fallthru
        _
    $region6: #{tpu_custom_call.1} parent=1 // loop_footer
      %s20 = sadd.s32 1, %s16
    $region7: #{tpu_custom_call.1} parent=1 // loop_footer_branch
      %15 = sbr.rel target = $region3
    $region8: #{tpu_custom_call.1} parent=1 // loop_exit
      _
    %525 = vsyncpa [#allocation4], 1
    %s526 = scalar_lea.sflag [#allocation4], 1
    %527 = vsyncpa %s526, 1
    %528 = vsyncpa [#allocation7], 1
    %529 = vsyncpa [#allocation5], 1
    %s530 = scalar_lea.sflag [#allocation5], 1
    %531 = vsyncpa %s530, 1

</llo_original>
